<compile_context>
chip_gen: v6e
topology: v6e:2x2x1
jax: 0.10.0
libtpu: 0.0.40
codegen_flags: <defaults>
</compile_context>

<pallas_src>
import jax
import jax.numpy as jnp
from jax.experimental import pallas as pl
from jax.experimental.pallas import tpu as pltpu


# -----------------------------------------------------------------------------
# Kernels
# -----------------------------------------------------------------------------
def _fused_kernel(x_ref, w_ref, b_ref, lab_ref, te_ref, img_ref, txt_ref):
    # image_outputs = x @ w + b   (bf16 inputs, f32 accumulate on the MXU)
    acc = jnp.dot(x_ref[...], w_ref[...], preferred_element_type=jnp.float32)
    img_ref[...] = (acc + b_ref[...].astype(jnp.float32)).astype(img_ref.dtype)

    # text_outputs = text_embeds[labels, :]
    # Exact gather via a one-hot matmul entirely in VMEM: each one-hot row selects
    # exactly one table row (1.0 * v + 0.0 * rest), so the result is bit-faithful,
    # and the output is stored as one dense (tm, D) block.
    tm = lab_ref.shape[0]
    C = te_ref.shape[0]
    class_ids = jax.lax.broadcasted_iota(jnp.int32, (tm, C), 1)
    onehot = (lab_ref[...] == class_ids).astype(jnp.float32)            # (tm, C)
    txt = jnp.dot(onehot, te_ref[...], preferred_element_type=jnp.float32)
    txt_ref[...] = txt.astype(txt_ref.dtype)


def _linear_kernel(x_ref, w_ref, b_ref, img_ref):
    acc = jnp.dot(x_ref[...], w_ref[...], preferred_element_type=jnp.float32)
    img_ref[...] = (acc + b_ref[...].astype(jnp.float32)).astype(img_ref.dtype)


# -----------------------------------------------------------------------------
# TextWrapper forward
# -----------------------------------------------------------------------------
def text_wrapper_forward(inputs, params, text_embeds, labels=None, *, tm=None):
    B, D = inputs.shape
    out_dtype = inputs.dtype

    # bf16 feeds the MXU natively on v5e/v6e/v7x; accumulation stays f32 in-kernel.
    x = inputs.astype(jnp.bfloat16)
    w = params["w"].astype(jnp.bfloat16)
    b = params["b"].astype(jnp.float32)

    # M (batch) tile: full batch for tiny B, capped at 256 rows at scale.
    if tm is None:
        tm = B if B <= 256 else 256
    assert (tm % 8 == 0) or (tm == B), "M tile must be 8-aligned or the full extent"
    grid = (pl.cdiv(B, tm),)

    cparams = pltpu.CompilerParams(
        dimension_semantics=("parallel",),        # shardable across v7x's 2 TensorCores
        vmem_limit_bytes=64 * 1024 * 1024,        # explicit budget (v5e default is 16 MiB)
    )

    x_spec = pl.BlockSpec((tm, D), lambda i: (i, 0))
    w_spec = pl.BlockSpec((D, D), lambda i: (0, 0))     # weight resident across M tiles
    b_spec = pl.BlockSpec((1, D), lambda i: (0, 0))     # full-width bias, loaded once
    o_spec = pl.BlockSpec((tm, D), lambda i: (i, 0))    # lane/sublane-dense output block

    if labels is None:
        return pl.pallas_call(
            _linear_kernel,
            out_shape=jax.ShapeDtypeStruct((B, D), out_dtype),
            grid_spec=pltpu.PrefetchScalarGridSpec(
                num_scalar_prefetch=0,
                grid=grid,
                in_specs=[x_spec, w_spec, b_spec],
                out_specs=o_spec,
            ),
            compiler_params=cparams,
        )(x, w, b)

    C, Dt = text_embeds.shape
    assert Dt == D
    lab2d = labels.astype(jnp.int32).reshape(B, 1)

    img, txt = pl.pallas_call(
        _fused_kernel,
        out_shape=(
            jax.ShapeDtypeStruct((B, D), out_dtype),
            jax.ShapeDtypeStruct((B, D), text_embeds.dtype),
        ),
        grid_spec=pltpu.PrefetchScalarGridSpec(
            num_scalar_prefetch=0,
            grid=grid,
            in_specs=[
                x_spec,
                w_spec,
                b_spec,
                pl.BlockSpec((tm, 1), lambda i: (i, 0)),   # labels slice per M tile
                pl.BlockSpec((C, D), lambda i: (0, 0)),    # full table resident in VMEM
            ],
            out_specs=[o_spec, o_spec],
        ),
        compiler_params=cparams,
    )(x, w, b, lab2d, text_embeds)
    return (img, txt)


if __name__ == "__main__":
    B = 8        # batch of embeddings
    D = 256      # embedding dimensionality (stand-in for CLIP's 768)
    C = 32       # number of text classes (stand-in for 1000 ImageNet labels)

    key = jax.random.PRNGKey(0)
    k_x, k_w, k_b, k_te, k_lab = jax.random.split(key, 5)

    x = jax.random.normal(k_x, (B, D), dtype=jnp.float32)
    params = {
        "w": jax.random.normal(k_w, (D, D), dtype=jnp.float32) * (1.0 / D ** 0.5),
        "b": jax.random.normal(k_b, (1, D), dtype=jnp.float32) * 0.01,
    }
    # TODO(synk): synthetic frozen table replaces CLIP ViT-L/14 encode_text outputs.
    text_embeds = jax.random.normal(k_te, (C, D), dtype=jnp.float32)
    labels = jax.random.randint(k_lab, (B,), 0, C, dtype=jnp.int32)

    # Labelled path (tuple) and label-free path (single tensor).
    img_out, txt_out = text_wrapper_forward(x, params, text_embeds, labels)
    img_only = text_wrapper_forward(x, params, text_embeds, None)
    jax.block_until_ready((img_out, txt_out, img_only))

    # Pure-JAX reference with the same bf16 casts applied to the matmul operands.
    xb = x.astype(jnp.bfloat16).astype(jnp.float32)
    wb = params["w"].astype(jnp.bfloat16).astype(jnp.float32)
    ref_img = xb @ wb + params["b"]
    ref_txt = text_embeds[labels, :]

    assert jnp.allclose(img_out, ref_img, atol=1e-3, rtol=1e-3)
    assert jnp.allclose(img_only, ref_img, atol=1e-3, rtol=1e-3)
    assert jnp.allclose(txt_out, ref_txt, atol=1e-6, rtol=1e-6)

    print("KERNEL_OK")
</pallas_src>

<mosaic_0001>
module attributes {stable_mosaic.version = 11 : i64} {
  func.func @_fused_kernel(%arg0: i32, %arg1: memref<8x256xbf16, #tpu.memory_space<vmem>>, %arg2: memref<256x256xbf16, #tpu.memory_space<vmem>>, %arg3: memref<1x256xf32, #tpu.memory_space<vmem>>, %arg4: memref<8x1xi32, #tpu.memory_space<vmem>>, %arg5: memref<32x256xf32, #tpu.memory_space<vmem>>, %arg6: memref<8x256xf32, #tpu.memory_space<vmem>>, %arg7: memref<8x256xf32, #tpu.memory_space<vmem>>) attributes {dimension_semantics = [#tpu.dimension_semantics<parallel>], iteration_bounds = array<i64: 1>, scalar_prefetch = 0 : i64, scratch_operands = 0 : i64, tpu.core_type = #tpu.core_type<tc>, window_params = [{transform_indices = @transform_0, window_bounds = array<i64: 8, 256>}, {pipeline_mode = #tpu.pipeline_mode<synchronous>, transform_indices = @transform_1, window_bounds = array<i64: 256, 256>}, {pipeline_mode = #tpu.pipeline_mode<synchronous>, transform_indices = @transform_2, window_bounds = array<i64: 1, 256>}, {transform_indices = @transform_3, window_bounds = array<i64: 8, 1>}, {pipeline_mode = #tpu.pipeline_mode<synchronous>, transform_indices = @transform_4, window_bounds = array<i64: 32, 256>}, {transform_indices = @transform_5, window_bounds = array<i64: 8, 256>}, {transform_indices = @transform_6, window_bounds = array<i64: 8, 256>}]} {
    %c0 = arith.constant 0 : index
    %c0_0 = arith.constant 0 : index
    %0 = vector.load %arg1[%c0, %c0_0] : memref<8x256xbf16, #tpu.memory_space<vmem>>, vector<8x256xbf16>
    %c0_1 = arith.constant 0 : index
    %c0_2 = arith.constant 0 : index
    %1 = vector.load %arg2[%c0_1, %c0_2] : memref<256x256xbf16, #tpu.memory_space<vmem>>, vector<256x256xbf16>
    %cst = arith.constant dense<0.000000e+00> : vector<8x256xf32>
    %2 = tpu.matmul %0, %1, %cst {dimension_numbers = #tpu.dot_dimension_numbers<[1], [0], [0], [1], [0, 0, 1, 1], [], []>} : vector<8x256xbf16>, vector<256x256xbf16>, vector<8x256xf32> -> vector<8x256xf32>
    %c0_3 = arith.constant 0 : index
    %c0_4 = arith.constant 0 : index
    %3 = vector.load %arg3[%c0_3, %c0_4] : memref<1x256xf32, #tpu.memory_space<vmem>>, vector<1x256xf32>
    %4 = vector.broadcast %3 : vector<1x256xf32> to vector<8x256xf32>
    %5 = arith.addf %2, %4 : vector<8x256xf32>
    %c0_5 = arith.constant 0 : index
    %c0_6 = arith.constant 0 : index
    %6 = vector.load %arg6[%c0_5, %c0_6] : memref<8x256xf32, #tpu.memory_space<vmem>>, vector<8x256xf32>
    tpu.vector_store %arg6[%c0_5, %c0_6], %5 {strides = array<i32>} : memref<8x256xf32, #tpu.memory_space<vmem>>, vector<8x256xf32>,
    %7 = tpu.iota {dimensions = array<i32: 1>} : vector<8x32xi32>
    %c0_7 = arith.constant 0 : index
    %c0_8 = arith.constant 0 : index
    %8 = vector.load %arg4[%c0_7, %c0_8] : memref<8x1xi32, #tpu.memory_space<vmem>>, vector<8x1xi32>
    %9 = vector.broadcast %8 : vector<8x1xi32> to vector<8x32xi32>
    %10 = arith.cmpi eq, %9, %7 : vector<8x32xi32>
    %11 = arith.extui %10 : vector<8x32xi1> to vector<8x32xi32>
    %12 = arith.sitofp %11 : vector<8x32xi32> to vector<8x32xf32>
    %c0_9 = arith.constant 0 : index
    %c0_10 = arith.constant 0 : index
    %13 = vector.load %arg5[%c0_9, %c0_10] : memref<32x256xf32, #tpu.memory_space<vmem>>, vector<32x256xf32>
    %cst_11 = arith.constant dense<0.000000e+00> : vector<8x256xf32>
    %14 = tpu.matmul %12, %13, %cst_11 {dimension_numbers = #tpu.dot_dimension_numbers<[1], [0], [0], [1], [0, 0, 1, 1], [], []>} : vector<8x32xf32>, vector<32x256xf32>, vector<8x256xf32> -> vector<8x256xf32>
    %c0_12 = arith.constant 0 : index
    %c0_13 = arith.constant 0 : index
    %15 = vector.load %arg7[%c0_12, %c0_13] : memref<8x256xf32, #tpu.memory_space<vmem>>, vector<8x256xf32>
    tpu.vector_store %arg7[%c0_12, %c0_13], %14 {strides = array<i32>} : memref<8x256xf32, #tpu.memory_space<vmem>>, vector<8x256xf32>,
    return
  }
  func.func @transform_0(%arg0: i32) -> (i32, i32) {
    %c0_i32 = arith.constant 0 : i32
    %c0_i32_0 = arith.constant 0 : i32
    return %arg0, %c0_i32 : i32, i32
  }
  func.func @transform_1(%arg0: i32) -> (i32, i32) {
    %c0_i32 = arith.constant 0 : i32
    %c0_i32_0 = arith.constant 0 : i32
    %c0_i32_1 = arith.constant 0 : i32
    return %c0_i32, %c0_i32_0 : i32, i32
  }
  func.func @transform_2(%arg0: i32) -> (i32, i32) {
    %c0_i32 = arith.constant 0 : i32
    %c0_i32_0 = arith.constant 0 : i32
    %c0_i32_1 = arith.constant 0 : i32
    return %c0_i32, %c0_i32_0 : i32, i32
  }
  func.func @transform_3(%arg0: i32) -> (i32, i32) {
    %c0_i32 = arith.constant 0 : i32
    %c0_i32_0 = arith.constant 0 : i32
    return %arg0, %c0_i32 : i32, i32
  }
  func.func @transform_4(%arg0: i32) -> (i32, i32) {
    %c0_i32 = arith.constant 0 : i32
    %c0_i32_0 = arith.constant 0 : i32
    %c0_i32_1 = arith.constant 0 : i32
    return %c0_i32, %c0_i32_0 : i32, i32
  }
  func.func @transform_5(%arg0: i32) -> (i32, i32) {
    %c0_i32 = arith.constant 0 : i32
    %c0_i32_0 = arith.constant 0 : i32
    return %arg0, %c0_i32 : i32, i32
  }
  func.func @transform_6(%arg0: i32) -> (i32, i32) {
    %c0_i32 = arith.constant 0 : i32
    %c0_i32_0 = arith.constant 0 : i32
    return %arg0, %c0_i32 : i32, i32
  }
}

</mosaic_0001>

<llo_original>
// kernel: tpu_custom_call.1
$region0: #{tpu_custom_call.1}
  #allocation0 [shape = 'u32[]', space=smem, size = 0x4, offset = 0x4, fixed_abs, tag = 'smem constant byte address 0x4 - core index']
  #allocation1 [shape = 'u32[144,128]{1,0:T(1,128)}', space=vmem, size = 0x12000, scoped, tag = 'internal scratch']
  %s0 = inlined_call_operand.vmem [shape: bf16[8,256], index: 0, kind: input, shape index: {}]
  %s1 = inlined_call_operand.hbm [shape: bf16[256,256], index: 1, kind: input, shape index: {}]
  %s2 = inlined_call_operand.vmem [shape: f32[1,256], index: 2, kind: input, shape index: {}]
  %s3 = inlined_call_operand.vmem [shape: s32[8,1], index: 3, kind: input, shape index: {}]
  %s4 = inlined_call_operand.hbm [shape: f32[32,256], index: 4, kind: input, shape index: {}]
  %s5 = inlined_call_operand.hbm [shape: f32[8,256], index: 5, kind: output, shape index: {0}]
  %s6 = inlined_call_operand.hbm [shape: f32[8,256], index: 6, kind: output, shape index: {1}]
  %7 = xla_tuple %s5, %s6
  %s8 = sld [smem:[#allocation0]]
  $region46: #{tpu_custom_call.1} parent=0
    _
  %s10 = ssub.s32 1, %s8
  %s11 = scalar_select 0, %s10, %s8
  $region1: #{tpu_custom_call.1} parent=0
    #allocation2 [shape = 'u8[131072]{0}', space=vmem, size = 0x20000, scoped, tag = 'input window, operand 1, single buffered']
    #allocation3 [shape = 's32[1]{0}', space=sflag, size = 0x4, scoped, tag = 'scoped memory for tpu_custom_call.1']
    #allocation4 [shape = 's32[1]{0}', space=sflag, size = 0x4, scoped, tag = 'scoped memory for tpu_custom_call.1']
    #allocation5 [shape = 'u8[32768]{0}', space=vmem, size = 0x8000, scoped, tag = 'input window, operand 4, single buffered']
    #allocation6 [shape = 's32[1]{0}', space=sflag, size = 0x4, scoped, tag = 'scoped memory for tpu_custom_call.1']
    #allocation7 [shape = 'u8[8192]{0}', space=vmem, size = 0x2000, scoped, tag = 'output window, operand 0, single buffered']
    #allocation8 [shape = 'u8[8192]{0}', space=vmem, size = 0x2000, scoped, tag = 'output window, operand 1, single buffered']
    #allocation9 [shape = 's32[1]{0}', space=sflag, size = 0x4, scoped, tag = 'scoped memory for tpu_custom_call.1']
    %12 = vsyncpa [#allocation3], 0
    %13 = vsyncpa [#allocation6], 0
    %14 = vsyncpa [#allocation4], 0
    %15 = vsyncpa [#allocation9], 0
    // Predicated region
    $region2: #{tpu_custom_call.1} parent=1 // pred_check
      _
    $region3: #{tpu_custom_call.1} parent=1 // pred_check_branch
      %17 = sbr.rel (0) target = $region5
    $region4: #{tpu_custom_call.1} parent=1 // pred_region
      _
    $region5: #{tpu_custom_call.1} parent=1 // pred_fallthru
      _
    // Predicated region
    $region6: #{tpu_custom_call.1} parent=1 // pred_check
      _
    $region7: #{tpu_custom_call.1} parent=1 // pred_check_branch
      %19 = sbr.rel (0) target = $region9
    $region8: #{tpu_custom_call.1} parent=1 // pred_region
      %s21 = ssub.s32 4096, 4096
      %22 = vsyncadd [#allocation3], %s21
      %s23 = sshll.u32 [#allocation2], 4
      %s24 = int_to_ptr.vmem [resolvable:$true] %s23
      %29 = dma.hbm_to_vmem [thread:$0]  %s1, 4096, %s24, [#allocation3], 128, 128, 8
    $region9: #{tpu_custom_call.1} parent=1 // pred_fallthru
      _
    // Predicated region
    $region10: #{tpu_custom_call.1} parent=1 // pred_check
      _
    $region11: #{tpu_custom_call.1} parent=1 // pred_check_branch
      %31 = sbr.rel (0) target = $region13
    $region12: #{tpu_custom_call.1} parent=1 // pred_region
      _
    $region13: #{tpu_custom_call.1} parent=1 // pred_fallthru
      _
    // Predicated region
    $region14: #{tpu_custom_call.1} parent=1 // pred_check
      _
    $region15: #{tpu_custom_call.1} parent=1 // pred_check_branch
      %33 = sbr.rel (0) target = $region17
    $region16: #{tpu_custom_call.1} parent=1 // pred_region
      _
    $region17: #{tpu_custom_call.1} parent=1 // pred_fallthru
      _
    // Predicated region
    $region18: #{tpu_custom_call.1} parent=1 // pred_check
      _
    $region19: #{tpu_custom_call.1} parent=1 // pred_check_branch
      %35 = sbr.rel (0) target = $region21
    $region20: #{tpu_custom_call.1} parent=1 // pred_region
      %s37 = ssub.s32 1024, 1024
      %38 = vsyncadd [#allocation6], %s37
      %s39 = sshll.u32 [#allocation5], 4
      %s40 = int_to_ptr.vmem [resolvable:$true] %s39
      %45 = dma.hbm_to_vmem [thread:$0]  %s4, 1024, %s40, [#allocation6], 256, 256, 16
    $region21: #{tpu_custom_call.1} parent=1 // pred_fallthru
      _
    // Predicated region
    $region22: #{tpu_custom_call.1} parent=1 // pred_check
      _
    $region23: #{tpu_custom_call.1} parent=1 // pred_check_branch
      %47 = sbr.rel (0) target = $region25
    $region24: #{tpu_custom_call.1} parent=1 // pred_region
      %48 = dma.done [#allocation3], 4096
    $region25: #{tpu_custom_call.1} parent=1 // pred_fallthru
      _
    // Predicated region
    $region26: #{tpu_custom_call.1} parent=1 // pred_check
      _
    $region27: #{tpu_custom_call.1} parent=1 // pred_check_branch
      %50 = sbr.rel (0) target = $region29
    $region28: #{tpu_custom_call.1} parent=1 // pred_region
      %51 = dma.done [#allocation6], 1024
    $region29: #{tpu_custom_call.1} parent=1 // pred_fallthru
      _
    %v52 = vld [vmem:[%s0] sm:$0xff]
    %v53 = vld [vmem:[#allocation2] sm:$0xff]
    %v54 = vld [vmem:[#allocation2 + $0x8] sm:$0xff]
    %v55 = vld [vmem:[#allocation2 + $0x10] sm:$0xff]
    %v56 = vld [vmem:[#allocation2 + $0x18] sm:$0xff]
    %v57 = vld [vmem:[#allocation2 + $0x20] sm:$0xff]
    %v58 = vld [vmem:[#allocation2 + $0x28] sm:$0xff]
    %v59 = vld [vmem:[#allocation2 + $0x30] sm:$0xff]
    %v60 = vld [vmem:[#allocation2 + $0x38] sm:$0xff]
    %v61 = vld [vmem:[#allocation2 + $0x40] sm:$0xff]
    %v62 = vld [vmem:[#allocation2 + $0x48] sm:$0xff]
    %v63 = vld [vmem:[#allocation2 + $0x50] sm:$0xff]
    %v64 = vld [vmem:[#allocation2 + $0x58] sm:$0xff]
    %v65 = vld [vmem:[#allocation2 + $0x60] sm:$0xff]
    %v66 = vld [vmem:[#allocation2 + $0x68] sm:$0xff]
    %v67 = vld [vmem:[#allocation2 + $0x70] sm:$0xff]
    %v68 = vld [vmem:[#allocation2 + $0x78] sm:$0xff]
    %v69 = vld [vmem:[#allocation2 + $0x80] sm:$0xff]
    %v70 = vld [vmem:[#allocation2 + $0x88] sm:$0xff]
    %v71 = vld [vmem:[#allocation2 + $0x90] sm:$0xff]
    %v72 = vld [vmem:[#allocation2 + $0x98] sm:$0xff]
    %v73 = vld [vmem:[#allocation2 + $0xa0] sm:$0xff]
    %v74 = vld [vmem:[#allocation2 + $0xa8] sm:$0xff]
    %v75 = vld [vmem:[#allocation2 + $0xb0] sm:$0xff]
    %v76 = vld [vmem:[#allocation2 + $0xb8] sm:$0xff]
    %v77 = vld [vmem:[#allocation2 + $0xc0] sm:$0xff]
    %v78 = vld [vmem:[#allocation2 + $0xc8] sm:$0xff]
    %v79 = vld [vmem:[#allocation2 + $0xd0] sm:$0xff]
    %v80 = vld [vmem:[#allocation2 + $0xd8] sm:$0xff]
    %v81 = vld [vmem:[#allocation2 + $0xe0] sm:$0xff]
    %v82 = vld [vmem:[#allocation2 + $0xe8] sm:$0xff]
    %v83 = vld [vmem:[#allocation2 + $0xf0] sm:$0xff]
    %v84 = vld [vmem:[#allocation2 + $0xf8] sm:$0xff]
    %v85 = vld [vmem:[%s2] sm:$0x3]
    %v87 = vlaneseq
    %v88 = vshrl.u32 %v87, 7
    %v89 = vsub.s32 0, %v88
    %v90 = vrot.slane %v85, %v89
    %v91 = vlaneseq
    %v92 = vshrl.u32 %v91, 7
    %v93 = vsub.s32 1, %v92
    %v94 = vrot.slane %v85, %v93
    %v98 = vunpack.c.l.b16 %v52
    %v99 = vunpack.c.h.b16 %v52
    %v100 = vpack.c.b16 %v98, %v98
    %v101 = vpack.c.b16 %v99, %v99
    %v136 = vunpack.c.l.b16 %v53
    %v137 = vunpack.c.h.b16 %v53
    %v138 = vunpack.c.l.b16 %v54
    %v139 = vunpack.c.h.b16 %v54
    %v140 = vunpack.c.l.b16 %v55
    %v141 = vunpack.c.h.b16 %v55
    %v142 = vunpack.c.l.b16 %v56
    %v143 = vunpack.c.h.b16 %v56
    %v144 = vunpack.c.l.b16 %v57
    %v145 = vunpack.c.h.b16 %v57
    %v146 = vunpack.c.l.b16 %v58
    %v147 = vunpack.c.h.b16 %v58
    %v148 = vunpack.c.l.b16 %v59
    %v149 = vunpack.c.h.b16 %v59
    %v150 = vunpack.c.l.b16 %v60
    %v151 = vunpack.c.h.b16 %v60
    %v152 = vunpack.c.l.b16 %v61
    %v153 = vunpack.c.h.b16 %v61
    %v154 = vunpack.c.l.b16 %v62
    %v155 = vunpack.c.h.b16 %v62
    %v156 = vunpack.c.l.b16 %v63
    %v157 = vunpack.c.h.b16 %v63
    %v158 = vunpack.c.l.b16 %v64
    %v159 = vunpack.c.h.b16 %v64
    %v160 = vunpack.c.l.b16 %v65
    %v161 = vunpack.c.h.b16 %v65
    %v162 = vunpack.c.l.b16 %v66
    %v163 = vunpack.c.h.b16 %v66
    %v164 = vunpack.c.l.b16 %v67
    %v165 = vunpack.c.h.b16 %v67
    %v166 = vunpack.c.l.b16 %v68
    %v167 = vunpack.c.h.b16 %v68
    %v168 = vunpack.c.l.b16 %v69
    %v169 = vunpack.c.h.b16 %v69
    %v170 = vunpack.c.l.b16 %v70
    %v171 = vunpack.c.h.b16 %v70
    %v172 = vunpack.c.l.b16 %v71
    %v173 = vunpack.c.h.b16 %v71
    %v174 = vunpack.c.l.b16 %v72
    %v175 = vunpack.c.h.b16 %v72
    %v176 = vunpack.c.l.b16 %v73
    %v177 = vunpack.c.h.b16 %v73
    %v178 = vunpack.c.l.b16 %v74
    %v179 = vunpack.c.h.b16 %v74
    %v180 = vunpack.c.l.b16 %v75
    %v181 = vunpack.c.h.b16 %v75
    %v182 = vunpack.c.l.b16 %v76
    %v183 = vunpack.c.h.b16 %v76
    %v184 = vunpack.c.l.b16 %v77
    %v185 = vunpack.c.h.b16 %v77
    %v186 = vunpack.c.l.b16 %v78
    %v187 = vunpack.c.h.b16 %v78
    %v188 = vunpack.c.l.b16 %v79
    %v189 = vunpack.c.h.b16 %v79
    %v190 = vunpack.c.l.b16 %v80
    %v191 = vunpack.c.h.b16 %v80
    %v192 = vunpack.c.l.b16 %v81
    %v193 = vunpack.c.h.b16 %v81
    %v194 = vunpack.c.l.b16 %v82
    %v195 = vunpack.c.h.b16 %v82
    %v196 = vunpack.c.l.b16 %v83
    %v197 = vunpack.c.h.b16 %v83
    %v198 = vunpack.c.l.b16 %v84
    %v199 = vunpack.c.h.b16 %v84
    %v200 = vpack.c.b16 %v138, %v136
    %v201 = vpack.c.b16 %v139, %v137
    %v202 = vpack.c.b16 %v142, %v140
    %v203 = vpack.c.b16 %v143, %v141
    %v204 = vpack.c.b16 %v146, %v144
    %v205 = vpack.c.b16 %v147, %v145
    %v206 = vpack.c.b16 %v150, %v148
    %v207 = vpack.c.b16 %v151, %v149
    %v208 = vpack.c.b16 %v154, %v152
    %v209 = vpack.c.b16 %v155, %v153
    %v210 = vpack.c.b16 %v158, %v156
    %v211 = vpack.c.b16 %v159, %v157
    %v212 = vpack.c.b16 %v162, %v160
    %v213 = vpack.c.b16 %v163, %v161
    %v214 = vpack.c.b16 %v166, %v164
    %v215 = vpack.c.b16 %v167, %v165
    %v216 = vpack.c.b16 %v170, %v168
    %v217 = vpack.c.b16 %v171, %v169
    %v218 = vpack.c.b16 %v174, %v172
    %v219 = vpack.c.b16 %v175, %v173
    %v220 = vpack.c.b16 %v178, %v176
    %v221 = vpack.c.b16 %v179, %v177
    %v222 = vpack.c.b16 %v182, %v180
    %v223 = vpack.c.b16 %v183, %v181
    %v224 = vpack.c.b16 %v186, %v184
    %v225 = vpack.c.b16 %v187, %v185
    %v226 = vpack.c.b16 %v190, %v188
    %v227 = vpack.c.b16 %v191, %v189
    %v228 = vpack.c.b16 %v194, %v192
    %v229 = vpack.c.b16 %v195, %v193
    %v230 = vpack.c.b16 %v198, %v196
    %v231 = vpack.c.b16 %v199, %v197
    %264 = vmatprep.subr.bf16.mxu0 %v215
    %265 = vmatpush1.bf16.msra.mxu0 %v214
    %266 = vmatprep.subr.bf16.mxu0 %v213
    %267 = vmatpush1.bf16.msra.mxu0 %v212
    %268 = vmatprep.subr.bf16.mxu0 %v211
    %269 = vmatpush1.bf16.msra.mxu0 %v210
    %270 = vmatprep.subr.bf16.mxu0 %v209
    %271 = vmatpush1.bf16.msra.mxu0 %v208
    %272 = vmatprep.subr.bf16.mxu0 %v207
    %273 = vmatpush1.bf16.msra.mxu0 %v206
    %274 = vmatprep.subr.bf16.mxu0 %v205
    %275 = vmatpush1.bf16.msra.mxu0 %v204
    %276 = vmatprep.subr.bf16.mxu0 %v203
    %277 = vmatpush1.bf16.msra.mxu0 %v202
    %278 = vmatprep.subr.bf16.mxu0 %v201
    %279 = vmatpush1.bf16.msra.mxu0 %v200
    %280 = vmatprep.subr.bf16.mxu0 %v231
    %281 = vmatpush2.bf16.msra.mxu0 %v230
    %282 = vmatprep.subr.bf16.mxu0 %v229
    %283 = vmatpush2.bf16.msra.mxu0 %v228
    %284 = vmatprep.subr.bf16.mxu0 %v227
    %285 = vmatpush2.bf16.msra.mxu0 %v226
    %286 = vmatprep.subr.bf16.mxu0 %v225
    %287 = vmatpush2.bf16.msra.mxu0 %v224
    %288 = vmatprep.subr.bf16.mxu0 %v223
    %289 = vmatpush2.bf16.msra.mxu0 %v222
    %290 = vmatprep.subr.bf16.mxu0 %v221
    %291 = vmatpush2.bf16.msra.mxu0 %v220
    %292 = vmatprep.subr.bf16.mxu0 %v219
    %293 = vmatpush2.bf16.msra.mxu0 %v218
    %294 = vmatprep.subr.bf16.mxu0 %v217
    %295 = vmatpush2.bf16.msra.mxu0 %v216
    %296 = vmatprep.mubr.bf16.mxu0 %v101
    %297 = vmatmul.mubr.bf16.gmra.mxu0 %v100
    %v298 = vpop.f32.mrf.mxu0
    %v299 = vadd.f32 %v90, %v298
    %v300 = vpop.f32.mrf.mxu0
    %v301 = vadd.f32 %v94, %v300
    %v302 = vpop.f32.mrf.mxu0
    %v303 = vpop.f32.mrf.mxu0
    %304 = vdwg.mxu0
    %305 = vst [vmem:[#allocation7] sm:$0xff] %v299
    %306 = vst [vmem:[#allocation7 + $0x8] sm:$0xff] %v301
    %v307 = vlaneseq
    %v308 = vand.u32 %v307, 127
    %v309 = vld [vmem:[%s3] sm:$0xff]
    %310 = vset.pattern.permute.xlu0 0
    %311 = vperm.xlu0 %310, %v309
    %v312 = vpop.permute.xlu0 %311
    %vm313 = vcmp.eq.s32.totalorder %v312, %v308
    %v314 = vsel %vm313, 1, 0
    %v315 = vcvt.s32.f32 %v314
    %v316 = vld [vmem:[#allocation5] sm:$0xff]
    %v317 = vld [vmem:[#allocation5 + $0x8] sm:$0xff]
    %v318 = vld [vmem:[#allocation5 + $0x10] sm:$0xff]
    %v319 = vld [vmem:[#allocation5 + $0x18] sm:$0xff]
    %v320 = vld [vmem:[#allocation5 + $0x20] sm:$0xff]
    %v321 = vld [vmem:[#allocation5 + $0x28] sm:$0xff]
    %v322 = vld [vmem:[#allocation5 + $0x30] sm:$0xff]
    %v323 = vld [vmem:[#allocation5 + $0x38] sm:$0xff]
    %vm324 = vcmask 261120
    %v326 = vsel %vm324, %v315, 0
    %328 = vmatprep.subr.mxu0 0.0
    %329 = vmatpush1.msra.mxu0 0.0
    %330 = vmatprep.subr.mxu0 0.0
    %331 = vmatpush1.msra.mxu0 0.0
    %332 = vmatprep.subr.mxu0 0.0
    %333 = vmatpush1.msra.mxu0 0.0
    %334 = vmatprep.subr.mxu0 0.0
    %335 = vmatpush1.msra.mxu0 0.0
    %336 = vmatprep.subr.mxu0 0.0
    %337 = vmatpush1.msra.mxu0 0.0
    %338 = vmatprep.subr.mxu0 0.0
    %339 = vmatpush1.msra.mxu0 0.0
    %340 = vmatprep.subr.mxu0 0.0
    %341 = vmatpush1.msra.mxu0 0.0
    %342 = vmatprep.subr.mxu0 0.0
    %343 = vmatpush1.msra.mxu0 0.0
    %344 = vmatprep.subr.mxu0 0.0
    %345 = vmatpush1.msra.mxu0 0.0
    %346 = vmatprep.subr.mxu0 0.0
    %347 = vmatpush1.msra.mxu0 0.0
    %348 = vmatprep.subr.mxu0 0.0
    %349 = vmatpush1.msra.mxu0 0.0
    %350 = vmatprep.subr.mxu0 0.0
    %351 = vmatpush1.msra.mxu0 0.0
    %352 = vmatprep.subr.mxu0 %v323
    %353 = vmatpush1.msra.mxu0 %v322
    %354 = vmatprep.subr.mxu0 %v321
    %355 = vmatpush1.msra.mxu0 %v320
    %356 = vmatprep.subr.mxu0 %v319
    %357 = vmatpush1.msra.mxu0 %v318
    %358 = vmatprep.subr.mxu0 %v317
    %359 = vmatpush1.msra.mxu0 %v316
    %360 = vmatprep.subr.mxu0 0.0
    %361 = vmatpush2.msra.mxu0 0.0
    %362 = vmatprep.subr.mxu0 0.0
    %363 = vmatpush2.msra.mxu0 0.0
    %364 = vmatprep.subr.mxu0 0.0
    %365 = vmatpush2.msra.mxu0 0.0
    %366 = vmatprep.subr.mxu0 0.0
    %367 = vmatpush2.msra.mxu0 0.0
    %368 = vmatprep.subr.mxu0 0.0
    %369 = vmatpush2.msra.mxu0 0.0
    %370 = vmatprep.subr.mxu0 0.0
    %371 = vmatpush2.msra.mxu0 0.0
    %372 = vmatprep.subr.mxu0 0.0
    %373 = vmatpush2.msra.mxu0 0.0
    %374 = vmatprep.subr.mxu0 0.0
    %375 = vmatpush2.msra.mxu0 0.0
    %376 = vmatprep.subr.mxu0 0.0
    %377 = vmatpush2.msra.mxu0 0.0
    %378 = vmatprep.subr.mxu0 0.0
    %379 = vmatpush2.msra.mxu0 0.0
    %380 = vmatprep.subr.mxu0 0.0
    %381 = vmatpush2.msra.mxu0 0.0
    %382 = vmatprep.subr.mxu0 0.0
    %383 = vmatpush2.msra.mxu0 0.0
    %384 = vmatprep.subr.mxu0 0.0
    %385 = vmatpush2.msra.mxu0 0.0
    %386 = vmatprep.subr.mxu0 0.0
    %387 = vmatpush2.msra.mxu0 0.0
    %388 = vmatprep.subr.mxu0 0.0
    %389 = vmatpush2.msra.mxu0 0.0
    %390 = vmatprep.subr.mxu0 0.0
    %391 = vmatpush2.msra.mxu0 0.0
    %392 = vmatprep.mubr.f32.mxu0 0.0
    %393 = vmatmul.mubr.f32.gmra.mxu0 %v326
    %v394 = vpop.f32.mrf.mxu0
    %v395 = vadd.f32 0.0, %v394
    %v396 = vpop.f32.mrf.mxu0
    %v397 = vadd.f32 0.0, %v396
    %398 = vdwg.mxu0
    %399 = vst [vmem:[#allocation8] sm:$0xff] %v395
    %400 = vst [vmem:[#allocation8 + $0x8] sm:$0xff] %v397
    // Predicated region
    $region30: #{tpu_custom_call.1} parent=1 // pred_check
      _
    $region31: #{tpu_custom_call.1} parent=1 // pred_check_branch
      %402 = sbr.rel (0) target = $region33
    $region32: #{tpu_custom_call.1} parent=1 // pred_region
      %s404 = ssub.s32 256, 256
      %405 = vsyncadd [#allocation4], %s404
      %s407 = sshll.u32 [#allocation7], 4
      %s408 = int_to_ptr.vmem [resolvable:$true] %s407
      %410 = dma.vmem_to_hbm [thread:$0]  %s408, 256, %s5, [#allocation4]
    $region33: #{tpu_custom_call.1} parent=1 // pred_fallthru
      _
    // Predicated region
    $region34: #{tpu_custom_call.1} parent=1 // pred_check
      _
    $region35: #{tpu_custom_call.1} parent=1 // pred_check_branch
      %412 = sbr.rel (0) target = $region37
    $region36: #{tpu_custom_call.1} parent=1 // pred_region
      %s414 = ssub.s32 256, 256
      %415 = vsyncadd [#allocation9], %s414
      %s417 = sshll.u32 [#allocation8], 4
      %s418 = int_to_ptr.vmem [resolvable:$true] %s417
      %420 = dma.vmem_to_hbm [thread:$0]  %s418, 256, %s6, [#allocation9]
    $region37: #{tpu_custom_call.1} parent=1 // pred_fallthru
      _
    // Predicated region
    $region38: #{tpu_custom_call.1} parent=1 // pred_check
      _
    $region39: #{tpu_custom_call.1} parent=1 // pred_check_branch
      %422 = sbr.rel (0) target = $region41
    $region40: #{tpu_custom_call.1} parent=1 // pred_region
      %423 = dma.done [#allocation4], 256
    $region41: #{tpu_custom_call.1} parent=1 // pred_fallthru
      _
    // Predicated region
    $region42: #{tpu_custom_call.1} parent=1 // pred_check
      _
    $region43: #{tpu_custom_call.1} parent=1 // pred_check_branch
      %425 = sbr.rel (0) target = $region45
    $region44: #{tpu_custom_call.1} parent=1 // pred_region
      %426 = dma.done [#allocation9], 256
    $region45: #{tpu_custom_call.1} parent=1 // pred_fallthru
      _
    %427 = vsyncpa [#allocation3], 1
    %428 = vsyncpa [#allocation6], 1
    %429 = vsyncpa [#allocation4], 1
    %430 = vsyncpa [#allocation9], 1

</llo_original>
